<compile_context>
chip_gen: v7x
topology: tpu7x:2x2x1
jax: 0.10.0
libtpu: 0.0.40
codegen_flags: <defaults>
</compile_context>

<pallas_src>
import jax
import jax.numpy as jnp
from jax import lax
from jax.experimental import pallas as pl
from jax.experimental.pallas import tpu as pltpu


def _bce_with_logits(x, t):
    # Numerically stable formulation, identical to
    # F.binary_cross_entropy_with_logits(pred, target, reduction='none'):
    #   loss = max(x, 0) - x * t + log(1 + exp(-|x|))
    # exp + log1p go to the EUP (separate bundle slot); on v5e/v6e the kernel
    # is HBM-bound so this is free.  On v7x with bf16 I/O the EUP may start to
    # bind — a VALU softplus polynomial would be the next step there.
    return jnp.maximum(x, 0.0) - x * t + jnp.log1p(jnp.exp(-jnp.abs(x)))


# ----------------------------- tile / VMEM budgeting ----------------------------

def _vmem_capacity_bytes():
    try:
        info = pltpu.get_tpu_info()
        cap = getattr(info, "vmem_capacity_bytes", None)
        if cap:
            return int(cap)
    except Exception:
        pass
    return 64 << 20  # safe fallback for any generation (v7x has 64 MiB)


def _round_down(x, m):
    return max((x // m) * m, m)


def _pick_tiles(B, N, pipelined_bytes_per_elem, budget_bytes, max_tile_elems=None):
    """Pick (bb, bn): lane axis as wide as possible first, then fill with bb."""
    max_elems = budget_bytes // max(pipelined_bytes_per_elem, 1)
    if max_tile_elems is not None:
        max_elems = min(max_elems, max_tile_elems)
    max_elems = max(max_elems, 8 * 128)

    # 1) Lane (last) axis: prefer bn == N (contiguous HBM bursts, no N-axis
    #    grid / masking); otherwise the widest multiple of 128 that still
    #    leaves at least 8 sublane rows.
    if N <= 128 or 8 * N <= max_elems:
        bn = N
    else:
        bn = _round_down(max_elems // 8, 128)

    # 2) Sublane axis fills the remaining budget.
    bb_cap = max(max_elems // bn, 8)
    bb = B if bb_cap >= B else _round_down(bb_cap, 8)
    return bb, bn


def _compiler_params(dim_sem, est_vmem_bytes, vmem_cap, vmem_limit_bytes):
    lim = vmem_limit_bytes
    if lim is None and est_vmem_bytes > (12 << 20):
        # Raise scoped VMEM only when needed; stay well under physical VMEM
        # on every generation (cap/2 => 32 MiB on v7x, 64 MiB on v5e/v6e).
        lim = min(est_vmem_bytes + (4 << 20), vmem_cap // 2)
    return pltpu.CompilerParams(dimension_semantics=dim_sem,
                                vmem_limit_bytes=lim)


# ----------------------------- elementwise kernel ------------------------------

def _make_elem_kernel(has_weight):
    def kernel(*refs):
        if has_weight:
            pred_ref, tgt_ref, w_ref, out_ref = refs
        else:
            pred_ref, tgt_ref, out_ref = refs
            w_ref = None
        x = pred_ref[...].astype(jnp.float32)
        t = tgt_ref[...].astype(jnp.float32)
        loss = _bce_with_logits(x, t)
        if has_weight:
            loss = w_ref[...].astype(jnp.float32) * loss
        out_ref[...] = loss.astype(out_ref.dtype)

    return kernel


# ------------------------------ reduction kernel --------------------------------

def _make_sum_kernel(has_weight, bb, bn, B, N, mask_b, mask_n):
    # No accumulator carry: every (bi, ni) grid point emits its own partial
    # sum, so both grid axes can be "parallel" (megacore-safe on v7x).
    def kernel(*refs):
        if has_weight:
            pred_ref, tgt_ref, w_ref, out_ref = refs
        else:
            pred_ref, tgt_ref, out_ref = refs
            w_ref = None

        x = pred_ref[...].astype(jnp.float32)
        t = tgt_ref[...].astype(jnp.float32)
        loss = _bce_with_logits(x, t)
        if has_weight:
            loss = w_ref[...].astype(jnp.float32) * loss

        # Zero ragged padding; masks are only built for statically-ragged axes.
        m = None
        if mask_b:
            rows = (lax.broadcasted_iota(jnp.int32, (bb, bn), 0)
                    + pl.program_id(0) * bb)
            m = rows < B
        if mask_n:
            cols = (lax.broadcasted_iota(jnp.int32, (bb, bn), 1)
                    + pl.program_id(1) * bn)
            cm = cols < N
            m = cm if m is None else (m & cm)
        if m is not None:
            loss = jnp.where(m, loss, 0.0)

        s = jnp.sum(loss)  # single XLU tree reduce per tile

        # Lane-dense (8, 128) output block (always a legal block shape); only
        # [0, 0] carries the partial sum, the rest is zero, so the wrapper can
        # simply jnp.sum the whole partials array.
        r0 = lax.broadcasted_iota(jnp.int32, (8, 128), 0) == 0
        c0 = lax.broadcasted_iota(jnp.int32, (8, 128), 1) == 0
        sblock = jnp.full((8, 128), s, dtype=jnp.float32)
        out_ref[...] = jnp.where(r0 & c0, sblock, 0.0)

    return kernel


# ------------------------------------ wrapper ----------------------------------

def sigmoid_bce_loss(pred, target, weight=None, avg_factor=None, *,
                     min_pallas_elems=1 << 18, max_tile_elems=None,
                     vmem_limit_bytes=None):
    """Mirror of SigmoidBinaryCrossEntropyLoss.forward.

    pred, target (and optional weight): (B, N_CLASS); bf16 or f32 inputs are
    accepted (math is always f32 in-kernel).  Returns the (B, N_CLASS)
    elementwise loss (in pred.dtype), or a scalar if avg_factor is given.
    """
    if target.ndim != pred.ndim:
        raise ValueError("target should be onehot code, with same dim as predicts.")

    B, N = pred.shape
    has_weight = weight is not None
    args = (pred, target) + ((weight,) if has_weight else ())

    # Tiny-input fast path: fixed pallas_call/grid overhead dominates; plain
    # XLA fusion is faster on every generation.
    if B * N < min_pallas_elems:
        loss = _bce_with_logits(pred.astype(jnp.float32),
                                target.astype(jnp.float32))
        if has_weight:
            loss = weight.astype(jnp.float32) * loss
        if avg_factor is None:
            return loss.astype(pred.dtype)
        return jnp.sum(loss) / (jnp.asarray(avg_factor, jnp.float32) + 1e-6)

    in_itemsize = sum(jnp.dtype(a.dtype).itemsize for a in args)
    out_itemsize = jnp.dtype(pred.dtype).itemsize if avg_factor is None else 0
    pipelined_bpe = 2 * (in_itemsize + out_itemsize)   # 2x: double-buffering

    vmem_cap = _vmem_capacity_bytes()
    budget = min((vmem_cap * 3) // 8, 48 << 20)  # ~24 MiB v7x, 48 MiB v5e/v6e
    bb, bn = _pick_tiles(B, N, pipelined_bpe, budget, max_tile_elems)
    nb, nn = pl.cdiv(B, bb), pl.cdiv(N, bn)

    io_spec = pl.BlockSpec((bb, bn), lambda i, j: (i, j))
    in_specs = [io_spec] * (2 + int(has_weight))
    in_bytes = sum(int(a.size) * jnp.dtype(a.dtype).itemsize for a in args)
    est_vmem = bb * bn * pipelined_bpe

    if avg_factor is None:
        out_dtype = pred.dtype
        cost = pl.CostEstimate(
            flops=8 * B * N,
            transcendentals=2 * B * N,
            bytes_accessed=in_bytes + B * N * jnp.dtype(out_dtype).itemsize,
        )
        return pl.pallas_call(
            _make_elem_kernel(has_weight),
            out_shape=jax.ShapeDtypeStruct((B, N), out_dtype),
            grid_spec=pltpu.PrefetchScalarGridSpec(
                num_scalar_prefetch=0,
                grid=(nb, nn),
                in_specs=in_specs,
                out_specs=io_spec,
            ),
            compiler_params=_compiler_params(("parallel", "parallel"),
                                             est_vmem, vmem_cap,
                                             vmem_limit_bytes),
            cost_estimate=cost,
        )(*args)

    # avg_factor path: per-(bi, ni) partial sums, finished with a tiny jnp.sum.
    mask_b = (B % bb) != 0
    mask_n = (N % bn) != 0
    est_vmem += 2 * 8 * 128 * 4  # lane-dense partials output tile
    cost = pl.CostEstimate(
        flops=9 * B * N,
        transcendentals=2 * B * N,
        bytes_accessed=in_bytes + nb * nn * 8 * 128 * 4,
    )
    partials = pl.pallas_call(
        _make_sum_kernel(has_weight, bb, bn, B, N, mask_b, mask_n),
        out_shape=jax.ShapeDtypeStruct((nb * 8, nn * 128), jnp.float32),
        grid_spec=pltpu.PrefetchScalarGridSpec(
            num_scalar_prefetch=0,
            grid=(nb, nn),
            in_specs=in_specs,
            out_specs=pl.BlockSpec((8, 128), lambda i, j: (i, j)),
        ),
        compiler_params=_compiler_params(("parallel", "parallel"),
                                         est_vmem, vmem_cap, vmem_limit_bytes),
        cost_estimate=cost,
    )(*args)
    total = jnp.sum(partials)
    return total / (jnp.asarray(avg_factor, jnp.float32) + 1e-6)


# ----------------------------------- reference ----------------------------------

def _ref_loss(pred, target, weight=None, avg_factor=None):
    loss = _bce_with_logits(pred.astype(jnp.float32), target.astype(jnp.float32))
    if weight is not None:
        loss = weight.astype(jnp.float32) * loss
    if avg_factor is not None:
        loss = jnp.sum(loss) / (jnp.float32(avg_factor) + 1e-6)
    return loss


if __name__ == "__main__":
    key = jax.random.PRNGKey(0)
    k1, k2, k3, k4, k5 = jax.random.split(key, 5)

    # Small (b, n_class) shapes, as in the module docstring.
    B, N_CLASS = 8, 128
    pred = jax.random.normal(k1, (B, N_CLASS), dtype=jnp.float32) * 3.0
    labels = jax.random.randint(k2, (B,), 0, N_CLASS)
    target = jax.nn.one_hot(labels, N_CLASS, dtype=jnp.float32)
    weight = jax.random.uniform(k3, (B, N_CLASS), dtype=jnp.float32)
    avg_factor = float(B)

    force = dict(min_pallas_elems=0)  # exercise the Pallas path on small shapes

    # 1) plain elementwise loss (Pallas)
    out1 = jax.block_until_ready(sigmoid_bce_loss(pred, target, **force))
    ref1 = _ref_loss(pred, target)
    assert jnp.allclose(out1, ref1, atol=1e-5, rtol=1e-5)

    # 2) with weight (Pallas)
    out2 = jax.block_until_ready(sigmoid_bce_loss(pred, target, weight=weight, **force))
    ref2 = _ref_loss(pred, target, weight=weight)
    assert jnp.allclose(out2, ref2, atol=1e-5, rtol=1e-5)

    # 3) weight + avg_factor (Pallas reduction -> scalar)
    out3 = jax.block_until_ready(
        sigmoid_bce_loss(pred, target, weight=weight, avg_factor=avg_factor, **force))
    ref3 = _ref_loss(pred, target, weight=weight, avg_factor=avg_factor)
    assert jnp.allclose(out3, ref3, atol=1e-4, rtol=1e-5)

    # 4) avg_factor without weight (unweighted reduction kernel)
    out4 = jax.block_until_ready(
        sigmoid_bce_loss(pred, target, avg_factor=avg_factor, **force))
    ref4 = _ref_loss(pred, target, avg_factor=avg_factor)
    assert jnp.allclose(out4, ref4, atol=1e-4, rtol=1e-5)

    # 5) ragged multi-tile grid (forces both edge masks + multi-block pipeline)
    B2, N2 = 20, 385
    pred2 = jax.random.normal(k4, (B2, N2), dtype=jnp.float32) * 3.0
    target2 = (jax.random.uniform(k5, (B2, N2)) > 0.5).astype(jnp.float32)
    out5 = jax.block_until_ready(
        sigmoid_bce_loss(pred2, target2, avg_factor=7.0,
                         min_pallas_elems=0, max_tile_elems=8 * 128))
    ref5 = _ref_loss(pred2, target2, avg_factor=7.0)
    assert jnp.allclose(out5, ref5, atol=1e-4, rtol=1e-4)

    out6 = jax.block_until_ready(
        sigmoid_bce_loss(pred2, target2, min_pallas_elems=0, max_tile_elems=8 * 128))
    ref6 = _ref_loss(pred2, target2)
    assert jnp.allclose(out6, ref6, atol=1e-5, rtol=1e-5)

    # 6) tiny-input fast path (default threshold -> plain jnp, no pallas_call)
    out7 = jax.block_until_ready(sigmoid_bce_loss(pred, target, weight=weight))
    assert jnp.allclose(out7, ref2, atol=1e-5, rtol=1e-5)

    print("KERNEL_OK")
</pallas_src>

<mosaic_0001>
module attributes {stable_mosaic.version = 11 : i64} {
  func.func @kernel(%arg0: i32, %arg1: i32, %arg2: memref<8x128xf32, #tpu.memory_space<vmem>>, %arg3: memref<8x128xf32, #tpu.memory_space<vmem>>, %arg4: memref<8x128xf32, #tpu.memory_space<vmem>>) attributes {dimension_semantics = [#tpu.dimension_semantics<parallel>, #tpu.dimension_semantics<parallel>], iteration_bounds = array<i64: 1, 1>, scalar_prefetch = 0 : i64, scratch_operands = 0 : i64, tpu.core_type = #tpu.core_type<tc>, window_params = [{transform_indices = @transform_0, window_bounds = array<i64: 8, 128>}, {transform_indices = @transform_1, window_bounds = array<i64: 8, 128>}, {transform_indices = @transform_2, window_bounds = array<i64: 8, 128>}]} {
    %c0 = arith.constant 0 : index
    %c0_0 = arith.constant 0 : index
    %0 = vector.load %arg2[%c0, %c0_0] : memref<8x128xf32, #tpu.memory_space<vmem>>, vector<8x128xf32>
    %c0_1 = arith.constant 0 : index
    %c0_2 = arith.constant 0 : index
    %1 = vector.load %arg3[%c0_1, %c0_2] : memref<8x128xf32, #tpu.memory_space<vmem>>, vector<8x128xf32>
    %cst = arith.constant 0.000000e+00 : f32
    %2 = vector.broadcast %cst : f32 to vector<8x128xf32>
    %3 = arith.maximumf %0, %2 : vector<8x128xf32>
    %4 = arith.mulf %0, %1 : vector<8x128xf32>
    %5 = arith.subf %3, %4 : vector<8x128xf32>
    %6 = math.absf %0 : vector<8x128xf32>
    %cst_3 = arith.constant 0.000000e+00 : f32
    %7 = vector.broadcast %cst_3 : f32 to vector<8x128xf32>
    %8 = arith.subf %7, %6 : vector<8x128xf32>
    %9 = math.exp %8 : vector<8x128xf32>
    %10 = math.log1p %9 : vector<8x128xf32>
    %11 = arith.addf %5, %10 : vector<8x128xf32>
    %c0_4 = arith.constant 0 : index
    %c0_5 = arith.constant 0 : index
    %12 = vector.load %arg4[%c0_4, %c0_5] : memref<8x128xf32, #tpu.memory_space<vmem>>, vector<8x128xf32>
    tpu.vector_store %arg4[%c0_4, %c0_5], %11 {strides = array<i32>} : memref<8x128xf32, #tpu.memory_space<vmem>>, vector<8x128xf32>,
    return
  }
  func.func @transform_0(%arg0: i32, %arg1: i32) -> (i32, i32) {
    %c0_i32 = arith.constant 0 : i32
    return %arg0, %arg1 : i32, i32
  }
  func.func @transform_1(%arg0: i32, %arg1: i32) -> (i32, i32) {
    %c0_i32 = arith.constant 0 : i32
    return %arg0, %arg1 : i32, i32
  }
  func.func @transform_2(%arg0: i32, %arg1: i32) -> (i32, i32) {
    %c0_i32 = arith.constant 0 : i32
    return %arg0, %arg1 : i32, i32
  }
}

</mosaic_0001>

<llo_original>
// kernel: tpu_custom_call.1
$region0: #{tpu_custom_call.1}
  #allocation0 [shape = 'u32[]', space=smem, size = 0x4, offset = 0x4, fixed_abs, tag = 'smem constant byte address 0x4 - core index']
  #allocation1 [shape = 'u32[144,128]{1,0:T(1,128)}', space=vmem, size = 0x12000, scoped, tag = 'internal scratch']
  %s0 = inlined_call_operand.hbm [shape: f32[8,128], index: 0, kind: input, shape index: {}]
  %s1 = inlined_call_operand.hbm [shape: f32[8,128], index: 1, kind: input, shape index: {}]
  %s2 = inlined_call_operand.hbm [shape: f32[8,128], index: 2, kind: output, shape index: {}]
  %s3 = sld [smem:[#allocation0]]
  $region26: #{tpu_custom_call.1} parent=0
    _
  %s5 = ssub.s32 1, %s3
  %s6 = scalar_select 0, %s5, %s3
  $region1: #{tpu_custom_call.1} parent=0
    #allocation2 [shape = 'u8[4096]{0}', space=vmem, size = 0x1000, scoped, tag = 'input window, operand 0, single buffered']
    #allocation3 [shape = 's32[1]{0}', space=sflag, size = 0x4, scoped, tag = 'scoped memory for tpu_custom_call.1']
    #allocation4 [shape = 's32[1]{0}', space=sflag, size = 0x4, scoped, tag = 'scoped memory for tpu_custom_call.1']
    #allocation5 [shape = 'u8[4096]{0}', space=vmem, size = 0x1000, scoped, tag = 'input window, operand 1, single buffered']
    #allocation6 [shape = 's32[1]{0}', space=sflag, size = 0x4, scoped, tag = 'scoped memory for tpu_custom_call.1']
    #allocation7 [shape = 'u8[4096]{0}', space=vmem, size = 0x1000, scoped, tag = 'output window, operand 0, single buffered']
    %7 = vsyncpa [#allocation3], 0
    %8 = vsyncpa [#allocation6], 0
    %9 = vsyncpa [#allocation4], 0
    // Predicated region
    $region2: #{tpu_custom_call.1} parent=1 // pred_check
      _
    $region3: #{tpu_custom_call.1} parent=1 // pred_check_branch
      %11 = sbr.rel (0) target = $region5
    $region4: #{tpu_custom_call.1} parent=1 // pred_region
      %s13 = ssub.s32 128, 128
      %14 = vsyncadd [#allocation3], %s13
      %s16 = sshll.u32 [#allocation2], 4
      %s17 = int_to_ptr.vmem [resolvable:$true] %s16
      %19 = dma.hbm_to_vmem [thread:$0]  %s0, 128, %s17, [#allocation3]
    $region5: #{tpu_custom_call.1} parent=1 // pred_fallthru
      _
    // Predicated region
    $region6: #{tpu_custom_call.1} parent=1 // pred_check
      _
    $region7: #{tpu_custom_call.1} parent=1 // pred_check_branch
      %21 = sbr.rel (0) target = $region9
    $region8: #{tpu_custom_call.1} parent=1 // pred_region
      %s23 = ssub.s32 128, 128
      %24 = vsyncadd [#allocation6], %s23
      %s26 = sshll.u32 [#allocation5], 4
      %s27 = int_to_ptr.vmem [resolvable:$true] %s26
      %29 = dma.hbm_to_vmem [thread:$0]  %s1, 128, %s27, [#allocation6]
    $region9: #{tpu_custom_call.1} parent=1 // pred_fallthru
      _
    // Predicated region
    $region10: #{tpu_custom_call.1} parent=1 // pred_check
      _
    $region11: #{tpu_custom_call.1} parent=1 // pred_check_branch
      %31 = sbr.rel (0) target = $region13
    $region12: #{tpu_custom_call.1} parent=1 // pred_region
      %32 = dma.done [#allocation3], 128
    $region13: #{tpu_custom_call.1} parent=1 // pred_fallthru
      _
    // Predicated region
    $region14: #{tpu_custom_call.1} parent=1 // pred_check
      _
    $region15: #{tpu_custom_call.1} parent=1 // pred_check_branch
      %34 = sbr.rel (0) target = $region17
    $region16: #{tpu_custom_call.1} parent=1 // pred_region
      %35 = dma.done [#allocation6], 128
    $region17: #{tpu_custom_call.1} parent=1 // pred_fallthru
      _
    %v36 = vld [vmem:[#allocation2] sm:$0xff]
    %v37 = vld [vmem:[#allocation5] sm:$0xff]
    %v38 = vmax.f32 %v36, 0.0
    %v39 = vmul.f32 %v36, %v37
    %v40 = vsub.f32 %v38, %v39
    %v41 = vand.u32 2147483647, %v36
    %v42 = vsub.f32 0.0, %v41
    %v43 = vmul.f32 %v42, 1.442695
    %v44 = vpow.pop %v43
    %v45 = vadd.f32 %v44, 1.0
    %v46 = vlog2.pop %v45
    %v47 = vmul.f32 %v46, 0.6931472
    %v48 = vmul.f32 -0.5, %v44
    %v49 = vadd.f32 %v48, 1.0
    %v50 = vmul.f32 %v49, %v44
    %v51 = vand.u32 2147483647, %v44
    %vm52 = vcmp.lt.f32.partialorder %v51, 0.0004427343
    %v53 = vsel %vm52, %v50, %v47
    %v54 = vadd.f32 %v40, %v53
    %55 = vst [vmem:[#allocation7] sm:$0xff] %v54
    // Predicated region
    $region18: #{tpu_custom_call.1} parent=1 // pred_check
      _
    $region19: #{tpu_custom_call.1} parent=1 // pred_check_branch
      %57 = sbr.rel (0) target = $region21
    $region20: #{tpu_custom_call.1} parent=1 // pred_region
      %s59 = ssub.s32 128, 128
      %60 = vsyncadd [#allocation4], %s59
      %s62 = sshll.u32 [#allocation7], 4
      %s63 = int_to_ptr.vmem [resolvable:$true] %s62
      %65 = dma.vmem_to_hbm [thread:$0]  %s63, 128, %s2, [#allocation4]
    $region21: #{tpu_custom_call.1} parent=1 // pred_fallthru
      _
    // Predicated region
    $region22: #{tpu_custom_call.1} parent=1 // pred_check
      _
    $region23: #{tpu_custom_call.1} parent=1 // pred_check_branch
      %67 = sbr.rel (0) target = $region25
    $region24: #{tpu_custom_call.1} parent=1 // pred_region
      %68 = dma.done [#allocation4], 128
    $region25: #{tpu_custom_call.1} parent=1 // pred_fallthru
      _
    %69 = vsyncpa [#allocation3], 1
    %70 = vsyncpa [#allocation6], 1
    %71 = vsyncpa [#allocation4], 1

</llo_original>
